<compile_context>
chip_gen: v6e
topology: v6e:2x2x1
jax: 0.10.0
libtpu: 0.0.40
codegen_flags: <defaults>
</compile_context>

<pallas_src>
import jax
import jax.numpy as jnp
from jax.experimental import pallas as pl
from jax.experimental.pallas import tpu as pltpu


def _softplus(x):
    # Matches torch.nn.Softplus(beta=1, threshold=20): identity for x > 20.
    # No clamp needed: exp() in the untaken branch only produces +inf (never
    # NaN), and jnp.where discards it.
    return jnp.where(x > 20.0, x, jnp.log1p(jnp.exp(x)))


def mlp_kernel(x_ref, *refs):
    """Fused MLP forward.

    refs = (w0, b0, w1, b1, ..., wL, bL, out_ref)
    Hidden layers get Softplus, the final layer is linear only.
    Matmuls run in x_ref.dtype (bf16 by default) with f32 accumulation;
    bias add / softplus run in f32.
    """
    o_ref = refs[-1]
    param_refs = refs[:-1]
    n_layers = len(param_refs) // 2
    compute_dtype = x_ref.dtype

    h = x_ref[...]
    for l in range(n_layers):
        w = param_refs[2 * l][...]          # compute_dtype, (d_in, d_out)
        b = param_refs[2 * l + 1][...]      # f32, (1, d_out)
        acc = jnp.dot(h, w, preferred_element_type=jnp.float32) + b
        if l != n_layers - 1:
            h = _softplus(acc).astype(compute_dtype)
        else:
            h = acc                          # final layer: linear, f32
    o_ref[...] = h.astype(o_ref.dtype)


def _round_up(v, m):
    return ((v + m - 1) // m) * m


def fully_connected_embed(x, params, *, tile_m=256, compute_dtype=jnp.bfloat16):
    """params: list of (W[in,out], b[out]) tuples, one per Linear layer."""
    B, in_dim = x.shape
    out_dim = params[-1][0].shape[1]
    out_dtype = x.dtype

    # --- batch tiling -------------------------------------------------------
    tile_m = max(8, int(tile_m))
    # Keep >= 2 grid steps for large batches so v7x's 2 TensorCores both work.
    half_b = _round_up((B + 1) // 2, 8)
    if half_b >= 128:
        tile_m = min(tile_m, half_b)
    tile_m = min(tile_m, _round_up(B, 8))
    grid = (pl.cdiv(B, tile_m),)

    # --- operands & block specs --------------------------------------------
    x_c = x.astype(compute_dtype)
    flat_args = [x_c]
    in_specs = [pl.BlockSpec((tile_m, in_dim), lambda i: (i, 0))]
    for w, b in params:
        w_c = w.astype(compute_dtype)
        b2 = b.reshape(1, -1).astype(jnp.float32)
        flat_args.append(w_c)
        flat_args.append(b2)
        # Whole weight / bias resident in VMEM; constant block index so the
        # pipeline only fetches them once.
        in_specs.append(pl.BlockSpec(w_c.shape, lambda i: (0, 0)))
        in_specs.append(pl.BlockSpec(b2.shape, lambda i: (0, 0)))

    out_specs = pl.BlockSpec((tile_m, out_dim), lambda i: (i, 0))

    # --- cost estimate (kernel is DMA/overhead bound at these shapes) -------
    dims = [in_dim] + [w.shape[1] for w, _ in params]
    flops = 2 * B * sum(a * c for a, c in zip(dims[:-1], dims[1:]))
    transcendentals = 2 * B * sum(dims[1:-1])  # exp + log1p per hidden unit
    param_bytes = sum(int(a.size) * jnp.dtype(a.dtype).itemsize
                      for a in flat_args[1:])
    bytes_accessed = (int(x_c.size) * jnp.dtype(compute_dtype).itemsize
                      + B * out_dim * jnp.dtype(out_dtype).itemsize
                      + param_bytes)
    cost = pl.CostEstimate(flops=int(flops),
                           transcendentals=int(transcendentals),
                           bytes_accessed=int(bytes_accessed))

    # --- VMEM budget: double-buffered tiles + resident params, with margin --
    tile_bytes = (tile_m * in_dim * jnp.dtype(compute_dtype).itemsize
                  + tile_m * out_dim * jnp.dtype(out_dtype).itemsize)
    needed = 2 * (tile_bytes + param_bytes)
    vmem_limit = int(min(64 * 1024 * 1024, max(4 * needed, 32 * 1024 * 1024)))

    return pl.pallas_call(
        mlp_kernel,
        out_shape=jax.ShapeDtypeStruct((B, out_dim), out_dtype),
        grid=grid,
        in_specs=in_specs,
        out_specs=out_specs,
        compiler_params=pltpu.CompilerParams(
            dimension_semantics=("parallel",),
            vmem_limit_bytes=vmem_limit,
        ),
        cost_estimate=cost,
    )(*flat_args)


def init_params(key, in_dim, out_dim, hidden_dims):
    """Deterministic torch.nn.Linear-style init (U[-1/sqrt(fan_in), +1/sqrt(fan_in)]).

    Weights are stored as (fan_in, fan_out) == torch weight transposed.
    """
    dims = [in_dim] + list(hidden_dims) + [out_dim]
    params = []
    for d_in, d_out in zip(dims[:-1], dims[1:]):
        key, kw, kb = jax.random.split(key, 3)
        bound = 1.0 / jnp.sqrt(jnp.float32(d_in))
        w = jax.random.uniform(kw, (d_in, d_out), jnp.float32, -bound, bound)
        b = jax.random.uniform(kb, (d_out,), jnp.float32, -bound, bound)
        params.append((w, b))
    return params
    # TODO(synk): the module also defines self.alpha = Parameter(1.0); it is
    # not used in forward(), so it has no kernel-side equivalent.


def reference_forward(x, params, compute_dtype=jnp.float32):
    """Pure-JAX reference; optionally rounds matmul operands to compute_dtype
    (to mirror the kernel's bf16-operand / f32-accumulation path)."""
    def cast(a):
        return a.astype(compute_dtype).astype(jnp.float32)

    h = cast(x)
    for l, (w, b) in enumerate(params):
        h = jnp.dot(h, cast(w), preferred_element_type=jnp.float32) + b
        if l != len(params) - 1:
            h = cast(_softplus(h))
    return h


if __name__ == "__main__":
    # Small shapes consistent with the module's flat-vector forward pass.
    batch = 256
    in_dim = 16
    hidden_dims = [32, 64]
    out_dim = 8

    key = jax.random.PRNGKey(0)
    key, kx = jax.random.split(key)
    x = jax.random.normal(kx, (batch, in_dim), jnp.float32)
    params = init_params(key, in_dim, out_dim, hidden_dims)

    # Default (bf16 MXU operands, f32 accumulation).
    out = fully_connected_embed(x, params)
    out = jax.block_until_ready(out)
    assert out.shape == (batch, out_dim)
    ref_bf16 = reference_forward(x, params, compute_dtype=jnp.bfloat16)
    assert jnp.allclose(out, ref_bf16, atol=1e-2, rtol=1e-2), (
        "mismatch vs bf16-matched reference")

    # Exact-f32 path sanity check.
    out_f32 = fully_connected_embed(x, params, compute_dtype=jnp.float32)
    out_f32 = jax.block_until_ready(out_f32)
    ref_f32 = reference_forward(x, params, compute_dtype=jnp.float32)
    assert jnp.allclose(out_f32, ref_f32, atol=1e-4, rtol=1e-4), (
        "mismatch vs f32 reference")

    print("KERNEL_OK")
</pallas_src>

<mosaic_0001>
module attributes {stable_mosaic.version = 11 : i64} {
  func.func @mlp_kernel(%arg0: i32, %arg1: memref<128x16xbf16, #tpu.memory_space<vmem>>, %arg2: memref<16x32xbf16, #tpu.memory_space<vmem>>, %arg3: memref<1x32xf32, #tpu.memory_space<vmem>>, %arg4: memref<32x64xbf16, #tpu.memory_space<vmem>>, %arg5: memref<1x64xf32, #tpu.memory_space<vmem>>, %arg6: memref<64x8xbf16, #tpu.memory_space<vmem>>, %arg7: memref<1x8xf32, #tpu.memory_space<vmem>>, %arg8: memref<128x8xf32, #tpu.memory_space<vmem>>) attributes {dimension_semantics = [#tpu.dimension_semantics<parallel>], iteration_bounds = array<i64: 2>, scalar_prefetch = 0 : i64, scratch_operands = 0 : i64, tpu.core_type = #tpu.core_type<tc>, window_params = [{transform_indices = @transform_0, window_bounds = array<i64: 128, 16>}, {pipeline_mode = #tpu.pipeline_mode<synchronous>, transform_indices = @transform_1, window_bounds = array<i64: 16, 32>}, {pipeline_mode = #tpu.pipeline_mode<synchronous>, transform_indices = @transform_2, window_bounds = array<i64: 1, 32>}, {pipeline_mode = #tpu.pipeline_mode<synchronous>, transform_indices = @transform_3, window_bounds = array<i64: 32, 64>}, {pipeline_mode = #tpu.pipeline_mode<synchronous>, transform_indices = @transform_4, window_bounds = array<i64: 1, 64>}, {pipeline_mode = #tpu.pipeline_mode<synchronous>, transform_indices = @transform_5, window_bounds = array<i64: 64, 8>}, {pipeline_mode = #tpu.pipeline_mode<synchronous>, transform_indices = @transform_6, window_bounds = array<i64: 1, 8>}, {transform_indices = @transform_7, window_bounds = array<i64: 128, 8>}]} {
    %c0 = arith.constant 0 : index
    %c0_0 = arith.constant 0 : index
    %0 = vector.load %arg1[%c0, %c0_0] : memref<128x16xbf16, #tpu.memory_space<vmem>>, vector<128x16xbf16>
    %c0_1 = arith.constant 0 : index
    %c0_2 = arith.constant 0 : index
    %1 = vector.load %arg2[%c0_1, %c0_2] : memref<16x32xbf16, #tpu.memory_space<vmem>>, vector<16x32xbf16>
    %c0_3 = arith.constant 0 : index
    %c0_4 = arith.constant 0 : index
    %2 = vector.load %arg3[%c0_3, %c0_4] : memref<1x32xf32, #tpu.memory_space<vmem>>, vector<1x32xf32>
    %cst = arith.constant dense<0.000000e+00> : vector<128x32xf32>
    %3 = tpu.matmul %0, %1, %cst {dimension_numbers = #tpu.dot_dimension_numbers<[1], [0], [0], [1], [0, 0, 1, 1], [], []>} : vector<128x16xbf16>, vector<16x32xbf16>, vector<128x32xf32> -> vector<128x32xf32>
    %4 = vector.broadcast %2 : vector<1x32xf32> to vector<128x32xf32>
    %5 = arith.addf %3, %4 : vector<128x32xf32>
    %cst_5 = arith.constant 2.000000e+01 : f32
    %6 = vector.broadcast %cst_5 : f32 to vector<128x32xf32>
    %7 = arith.cmpf ogt, %5, %6 : vector<128x32xf32>
    %8 = math.exp %5 : vector<128x32xf32>
    %9 = math.log1p %8 : vector<128x32xf32>
    %10 = arith.select %7, %5, %9 : vector<128x32xi1>, vector<128x32xf32>
    %11 = arith.truncf %10 : vector<128x32xf32> to vector<128x32xbf16>
    %c0_6 = arith.constant 0 : index
    %c0_7 = arith.constant 0 : index
    %12 = vector.load %arg4[%c0_6, %c0_7] : memref<32x64xbf16, #tpu.memory_space<vmem>>, vector<32x64xbf16>
    %c0_8 = arith.constant 0 : index
    %c0_9 = arith.constant 0 : index
    %13 = vector.load %arg5[%c0_8, %c0_9] : memref<1x64xf32, #tpu.memory_space<vmem>>, vector<1x64xf32>
    %cst_10 = arith.constant dense<0.000000e+00> : vector<128x64xf32>
    %14 = tpu.matmul %11, %12, %cst_10 {dimension_numbers = #tpu.dot_dimension_numbers<[1], [0], [0], [1], [0, 0, 1, 1], [], []>} : vector<128x32xbf16>, vector<32x64xbf16>, vector<128x64xf32> -> vector<128x64xf32>
    %15 = vector.broadcast %13 : vector<1x64xf32> to vector<128x64xf32>
    %16 = arith.addf %14, %15 : vector<128x64xf32>
    %cst_11 = arith.constant 2.000000e+01 : f32
    %17 = vector.broadcast %cst_11 : f32 to vector<128x64xf32>
    %18 = arith.cmpf ogt, %16, %17 : vector<128x64xf32>
    %19 = math.exp %16 : vector<128x64xf32>
    %20 = math.log1p %19 : vector<128x64xf32>
    %21 = arith.select %18, %16, %20 : vector<128x64xi1>, vector<128x64xf32>
    %22 = arith.truncf %21 : vector<128x64xf32> to vector<128x64xbf16>
    %c0_12 = arith.constant 0 : index
    %c0_13 = arith.constant 0 : index
    %23 = vector.load %arg6[%c0_12, %c0_13] : memref<64x8xbf16, #tpu.memory_space<vmem>>, vector<64x8xbf16>
    %c0_14 = arith.constant 0 : index
    %c0_15 = arith.constant 0 : index
    %24 = vector.load %arg7[%c0_14, %c0_15] : memref<1x8xf32, #tpu.memory_space<vmem>>, vector<1x8xf32>
    %cst_16 = arith.constant dense<0.000000e+00> : vector<128x8xf32>
    %25 = tpu.matmul %22, %23, %cst_16 {dimension_numbers = #tpu.dot_dimension_numbers<[1], [0], [0], [1], [0, 0, 1, 1], [], []>} : vector<128x64xbf16>, vector<64x8xbf16>, vector<128x8xf32> -> vector<128x8xf32>
    %26 = vector.broadcast %24 : vector<1x8xf32> to vector<128x8xf32>
    %27 = arith.addf %25, %26 : vector<128x8xf32>
    %c0_17 = arith.constant 0 : index
    %c0_18 = arith.constant 0 : index
    %28 = vector.load %arg8[%c0_17, %c0_18] : memref<128x8xf32, #tpu.memory_space<vmem>>, vector<128x8xf32>
    tpu.vector_store %arg8[%c0_17, %c0_18], %27 {strides = array<i32>} : memref<128x8xf32, #tpu.memory_space<vmem>>, vector<128x8xf32>,
    return
  }
  func.func @transform_0(%arg0: i32) -> (i32, i32) {
    %c0_i32 = arith.constant 0 : i32
    %c0_i32_0 = arith.constant 0 : i32
    return %arg0, %c0_i32 : i32, i32
  }
  func.func @transform_1(%arg0: i32) -> (i32, i32) {
    %c0_i32 = arith.constant 0 : i32
    %c0_i32_0 = arith.constant 0 : i32
    %c0_i32_1 = arith.constant 0 : i32
    return %c0_i32, %c0_i32_0 : i32, i32
  }
  func.func @transform_2(%arg0: i32) -> (i32, i32) {
    %c0_i32 = arith.constant 0 : i32
    %c0_i32_0 = arith.constant 0 : i32
    %c0_i32_1 = arith.constant 0 : i32
    return %c0_i32, %c0_i32_0 : i32, i32
  }
  func.func @transform_3(%arg0: i32) -> (i32, i32) {
    %c0_i32 = arith.constant 0 : i32
    %c0_i32_0 = arith.constant 0 : i32
    %c0_i32_1 = arith.constant 0 : i32
    return %c0_i32, %c0_i32_0 : i32, i32
  }
  func.func @transform_4(%arg0: i32) -> (i32, i32) {
    %c0_i32 = arith.constant 0 : i32
    %c0_i32_0 = arith.constant 0 : i32
    %c0_i32_1 = arith.constant 0 : i32
    return %c0_i32, %c0_i32_0 : i32, i32
  }
  func.func @transform_5(%arg0: i32) -> (i32, i32) {
    %c0_i32 = arith.constant 0 : i32
    %c0_i32_0 = arith.constant 0 : i32
    %c0_i32_1 = arith.constant 0 : i32
    return %c0_i32, %c0_i32_0 : i32, i32
  }
  func.func @transform_6(%arg0: i32) -> (i32, i32) {
    %c0_i32 = arith.constant 0 : i32
    %c0_i32_0 = arith.constant 0 : i32
    %c0_i32_1 = arith.constant 0 : i32
    return %c0_i32, %c0_i32_0 : i32, i32
  }
  func.func @transform_7(%arg0: i32) -> (i32, i32) {
    %c0_i32 = arith.constant 0 : i32
    %c0_i32_0 = arith.constant 0 : i32
    return %arg0, %c0_i32 : i32, i32
  }
}

</mosaic_0001>

<llo_original>
// kernel: tpu_custom_call.1
$region0: #{tpu_custom_call.1}
  #allocation0 [shape = 'u32[]', space=smem, size = 0x4, offset = 0x4, fixed_abs, tag = 'smem constant byte address 0x4 - core index']
  #allocation1 [shape = 'u32[144,128]{1,0:T(1,128)}', space=vmem, size = 0x12000, scoped, tag = 'internal scratch']
  %s0 = inlined_call_operand.vmem [shape: bf16[256,16], index: 0, kind: input, shape index: {}]
  %s1 = inlined_call_operand.vmem [shape: bf16[16,32], index: 1, kind: input, shape index: {}]
  %s2 = inlined_call_operand.vmem [shape: f32[1,32], index: 2, kind: input, shape index: {}]
  %s3 = inlined_call_operand.vmem [shape: bf16[32,64], index: 3, kind: input, shape index: {}]
  %s4 = inlined_call_operand.vmem [shape: f32[1,64], index: 4, kind: input, shape index: {}]
  %s5 = inlined_call_operand.vmem [shape: bf16[64,8], index: 5, kind: input, shape index: {}]
  %s6 = inlined_call_operand.vmem [shape: f32[1,8], index: 6, kind: input, shape index: {}]
  %s7 = inlined_call_operand.vmem [shape: f32[256,8], index: 7, kind: output, shape index: {}]
  %s8 = sld [smem:[#allocation0]]
  $region61: #{tpu_custom_call.1} parent=0
    _
  %s10 = ssub.s32 1, %s8
  %s11 = scalar_select 0, %s10, %s8
  loop: start=0, step=1, limit=4
  $region2: #{tpu_custom_call.1} parent=0 // loop_pre_header
    _
  $region3: #{tpu_custom_call.1} parent=0 // loop_header
    %s13 = sphi 0, %s17
    %p14 = scmp.ge.s32.totalorder %s13, 4
    %s23 = sphi 0, %s25
    %s26 = sphi 0, %s23
    %s27 = sphi 0, %s26
    %s43 = sphi 0, %s27
    %s47 = sphi 0, %s47
    %s49 = sphi 0, %s47
    %s50 = sphi 0, %s49
    %s64 = sphi 0, %s50
    %s68 = sphi 0, %s68
    %s70 = sphi 0, %s68
    %s71 = sphi 0, %s70
    %s85 = sphi 0, %s71
    %s89 = sphi 0, %s89
    %s91 = sphi 0, %s89
    %s92 = sphi 0, %s91
    %s106 = sphi 0, %s92
    %s110 = sphi 0, %s110
    %s112 = sphi 0, %s110
    %s113 = sphi 0, %s112
    %s127 = sphi 0, %s113
    %s131 = sphi 0, %s131
    %s133 = sphi 0, %s131
    %s134 = sphi 0, %s133
    %s148 = sphi 0, %s134
    %s152 = sphi 0, %s152
    %s154 = sphi 0, %s152
    %s155 = sphi 0, %s154
    %s169 = sphi 0, %s155
    %s175 = sphi 0, %s177
    %s178 = sphi 0, %s175
    %s179 = sphi 0, %s178
    %s195 = sphi 0, %s179
  $region4: #{tpu_custom_call.1} parent=0 // loop_header_branch
    %16 = sbr.rel (%p14) target = $region8
  $region5: #{tpu_custom_call.1} parent=0 // loop_body
    %s18 = ssub.s32 %s13, 1
    %s19 = ssub.s32 %s13, 2
    %s20 = sadd.s32 %s13, 1
    %s21 = ssub.s32 %s13, %s20
    %p22 = scmp.eq.s32.totalorder %s21, 0
    %s24 = sadd.s32 %s23, 1
    %s25 = scalar_select %p22, %s23, %s24
    %p28 = pneg %p22
    %p29 = scmp.eq.s32.totalorder %s13, 1
    %p30 = por %p28, %p29
    %p31 = scmp.ne.s32.totalorder %s23, %s26
    %p32 = scmp.eq.s32.totalorder %s13, 0
    %p33 = por %p31, %p32
    %p34 = scmp.ne.s32.totalorder %s23, %s26
    %p35 = scmp.eq.s32.totalorder %s18, 1
    %p36 = por %p34, %p35
    %p37 = scmp.ne.s32.totalorder %s26, %s27
    %p38 = scmp.eq.s32.totalorder %s18, 0
    %p39 = por %p37, %p38
    %p40 = scmp.ne.s32.totalorder %s26, %s27
    %p41 = scmp.eq.s32.totalorder %s19, 1
    %p42 = por %p40, %p41
    %p44 = scmp.ne.s32.totalorder %s27, %s43
    %p45 = scmp.eq.s32.totalorder %s19, 0
    %p46 = por %p44, %p45
    %s48 = sadd.s32 %s47, 1
    %p51 = scmp.eq.s32.totalorder %s13, 1
    %p52 = scmp.ne.s32.totalorder %s47, %s49
    %p53 = scmp.eq.s32.totalorder %s13, 0
    %p54 = por %p52, %p53
    %p55 = scmp.ne.s32.totalorder %s47, %s49
    %p56 = scmp.eq.s32.totalorder %s18, 1
    %p57 = por %p55, %p56
    %p58 = scmp.ne.s32.totalorder %s49, %s50
    %p59 = scmp.eq.s32.totalorder %s18, 0
    %p60 = por %p58, %p59
    %p61 = scmp.ne.s32.totalorder %s49, %s50
    %p62 = scmp.eq.s32.totalorder %s19, 1
    %p63 = por %p61, %p62
    %p65 = scmp.ne.s32.totalorder %s50, %s64
    %p66 = scmp.eq.s32.totalorder %s19, 0
    %p67 = por %p65, %p66
    %s69 = sadd.s32 %s68, 1
    %p72 = scmp.eq.s32.totalorder %s13, 1
    %p73 = scmp.ne.s32.totalorder %s68, %s70
    %p74 = scmp.eq.s32.totalorder %s13, 0
    %p75 = por %p73, %p74
    %p76 = scmp.ne.s32.totalorder %s68, %s70
    %p77 = scmp.eq.s32.totalorder %s18, 1
    %p78 = por %p76, %p77
    %p79 = scmp.ne.s32.totalorder %s70, %s71
    %p80 = scmp.eq.s32.totalorder %s18, 0
    %p81 = por %p79, %p80
    %p82 = scmp.ne.s32.totalorder %s70, %s71
    %p83 = scmp.eq.s32.totalorder %s19, 1
    %p84 = por %p82, %p83
    %p86 = scmp.ne.s32.totalorder %s71, %s85
    %p87 = scmp.eq.s32.totalorder %s19, 0
    %p88 = por %p86, %p87
    %s90 = sadd.s32 %s89, 1
    %p93 = scmp.eq.s32.totalorder %s13, 1
    %p94 = scmp.ne.s32.totalorder %s89, %s91
    %p95 = scmp.eq.s32.totalorder %s13, 0
    %p96 = por %p94, %p95
    %p97 = scmp.ne.s32.totalorder %s89, %s91
    %p98 = scmp.eq.s32.totalorder %s18, 1
    %p99 = por %p97, %p98
    %p100 = scmp.ne.s32.totalorder %s91, %s92
    %p101 = scmp.eq.s32.totalorder %s18, 0
    %p102 = por %p100, %p101
    %p103 = scmp.ne.s32.totalorder %s91, %s92
    %p104 = scmp.eq.s32.totalorder %s19, 1
    %p105 = por %p103, %p104
    %p107 = scmp.ne.s32.totalorder %s92, %s106
    %p108 = scmp.eq.s32.totalorder %s19, 0
    %p109 = por %p107, %p108
    %s111 = sadd.s32 %s110, 1
    %p114 = scmp.eq.s32.totalorder %s13, 1
    %p115 = scmp.ne.s32.totalorder %s110, %s112
    %p116 = scmp.eq.s32.totalorder %s13, 0
    %p117 = por %p115, %p116
    %p118 = scmp.ne.s32.totalorder %s110, %s112
    %p119 = scmp.eq.s32.totalorder %s18, 1
    %p120 = por %p118, %p119
    %p121 = scmp.ne.s32.totalorder %s112, %s113
    %p122 = scmp.eq.s32.totalorder %s18, 0
    %p123 = por %p121, %p122
    %p124 = scmp.ne.s32.totalorder %s112, %s113
    %p125 = scmp.eq.s32.totalorder %s19, 1
    %p126 = por %p124, %p125
    %p128 = scmp.ne.s32.totalorder %s113, %s127
    %p129 = scmp.eq.s32.totalorder %s19, 0
    %p130 = por %p128, %p129
    %s132 = sadd.s32 %s131, 1
    %p135 = scmp.eq.s32.totalorder %s13, 1
    %p136 = scmp.ne.s32.totalorder %s131, %s133
    %p137 = scmp.eq.s32.totalorder %s13, 0
    %p138 = por %p136, %p137
    %p139 = scmp.ne.s32.totalorder %s131, %s133
    %p140 = scmp.eq.s32.totalorder %s18, 1
    %p141 = por %p139, %p140
    %p142 = scmp.ne.s32.totalorder %s133, %s134
    %p143 = scmp.eq.s32.totalorder %s18, 0
    %p144 = por %p142, %p143
    %p145 = scmp.ne.s32.totalorder %s133, %s134
    %p146 = scmp.eq.s32.totalorder %s19, 1
    %p147 = por %p145, %p146
    %p149 = scmp.ne.s32.totalorder %s134, %s148
    %p150 = scmp.eq.s32.totalorder %s19, 0
    %p151 = por %p149, %p150
    %s153 = sadd.s32 %s152, 1
    %p156 = scmp.eq.s32.totalorder %s13, 1
    %p157 = scmp.ne.s32.totalorder %s152, %s154
    %p158 = scmp.eq.s32.totalorder %s13, 0
    %p159 = por %p157, %p158
    %p160 = scmp.ne.s32.totalorder %s152, %s154
    %p161 = scmp.eq.s32.totalorder %s18, 1
    %p162 = por %p160, %p161
    %p163 = scmp.ne.s32.totalorder %s154, %s155
    %p164 = scmp.eq.s32.totalorder %s18, 0
    %p165 = por %p163, %p164
    %p166 = scmp.ne.s32.totalorder %s154, %s155
    %p167 = scmp.eq.s32.totalorder %s19, 1
    %p168 = por %p166, %p167
    %p170 = scmp.ne.s32.totalorder %s155, %s169
    %p171 = scmp.eq.s32.totalorder %s19, 0
    %p172 = por %p170, %p171
    %s173 = ssub.s32 %s13, %s20
    %p174 = scmp.eq.s32.totalorder %s173, 0
    %s176 = sadd.s32 %s175, 1
    %s177 = scalar_select %p174, %s175, %s176
    %p180 = pneg %p174
    %p181 = scmp.eq.s32.totalorder %s13, 1
    %p182 = por %p180, %p181
    %p183 = scmp.ne.s32.totalorder %s175, %s178
    %p184 = scmp.eq.s32.totalorder %s13, 0
    %p185 = por %p183, %p184
    %p186 = scmp.ne.s32.totalorder %s175, %s178
    %p187 = scmp.eq.s32.totalorder %s18, 1
    %p188 = por %p186, %p187
    %p189 = scmp.ne.s32.totalorder %s178, %s179
    %p190 = scmp.eq.s32.totalorder %s18, 0
    %p191 = por %p189, %p190
    %p192 = scmp.ne.s32.totalorder %s178, %s179
    %p193 = scmp.eq.s32.totalorder %s19, 1
    %p194 = por %p192, %p193
    %p196 = scmp.ne.s32.totalorder %s179, %s195
    %p197 = scmp.eq.s32.totalorder %s19, 0
    %p198 = por %p196, %p197
    %p199 = scmp.le.s32.totalorder 1, %s13
    %p200 = scmp.lt.s32.totalorder %s13, 3
    %p201 = pnand %p199, %p200
    %p202 = pneg %p201
    // Predicated region
    $region9: #{tpu_custom_call.1} parent=5 // pred_check
      _
    $region10: #{tpu_custom_call.1} parent=5 // pred_check_branch
      %204 = sbr.rel (%p201) target = $region12
    $region11: #{tpu_custom_call.1} parent=5 // pred_region
      %s205 = ssub.s32 %s13, 1
      // Predicated region
      $region13: #{tpu_custom_call.1} parent=11 // pred_check
        %p206 = pneg %p60
      $region14: #{tpu_custom_call.1} parent=11 // pred_check_branch
        %208 = sbr.rel (%p206) target = $region16
      $region15: #{tpu_custom_call.1} parent=11 // pred_region
        _
      $region16: #{tpu_custom_call.1} parent=11 // pred_fallthru
        _
      // Predicated region
      $region17: #{tpu_custom_call.1} parent=11 // pred_check
        %p209 = pneg %p81
      $region18: #{tpu_custom_call.1} parent=11 // pred_check_branch
        %211 = sbr.rel (%p209) target = $region20
      $region19: #{tpu_custom_call.1} parent=11 // pred_region
        _
      $region20: #{tpu_custom_call.1} parent=11 // pred_fallthru
        _
      // Predicated region
      $region21: #{tpu_custom_call.1} parent=11 // pred_check
        %p212 = pneg %p102
      $region22: #{tpu_custom_call.1} parent=11 // pred_check_branch
        %214 = sbr.rel (%p212) target = $region24
      $region23: #{tpu_custom_call.1} parent=11 // pred_region
        _
      $region24: #{tpu_custom_call.1} parent=11 // pred_fallthru
        _
      // Predicated region
      $region25: #{tpu_custom_call.1} parent=11 // pred_check
        %p215 = pneg %p123
      $region26: #{tpu_custom_call.1} parent=11 // pred_check_branch
        %217 = sbr.rel (%p215) target = $region28
      $region27: #{tpu_custom_call.1} parent=11 // pred_region
        _
      $region28: #{tpu_custom_call.1} parent=11 // pred_fallthru
        _
      // Predicated region
      $region29: #{tpu_custom_call.1} parent=11 // pred_check
        %p218 = pneg %p144
      $region30: #{tpu_custom_call.1} parent=11 // pred_check_branch
        %220 = sbr.rel (%p218) target = $region32
      $region31: #{tpu_custom_call.1} parent=11 // pred_region
        _
      $region32: #{tpu_custom_call.1} parent=11 // pred_fallthru
        _
      // Predicated region
      $region33: #{tpu_custom_call.1} parent=11 // pred_check
        %p221 = pneg %p165
      $region34: #{tpu_custom_call.1} parent=11 // pred_check_branch
        %223 = sbr.rel (%p221) target = $region36
      $region35: #{tpu_custom_call.1} parent=11 // pred_region
        _
      $region36: #{tpu_custom_call.1} parent=11 // pred_fallthru
        _
    $region12: #{tpu_custom_call.1} parent=5 // pred_fallthru
      _
    %p224 = scmp.lt.s32.totalorder %s13, 2
    // Predicated region
    $region37: #{tpu_custom_call.1} parent=5 // pred_check
      %p225 = pneg %p224
    $region38: #{tpu_custom_call.1} parent=5 // pred_check_branch
      %227 = sbr.rel (%p225) target = $region40
    $region39: #{tpu_custom_call.1} parent=5 // pred_region
      // Predicated region
      $region41: #{tpu_custom_call.1} parent=39 // pred_check
        %p228 = pneg %p33
      $region42: #{tpu_custom_call.1} parent=39 // pred_check_branch
        %230 = sbr.rel (%p228) target = $region44
      $region43: #{tpu_custom_call.1} parent=39 // pred_region
        %s231 = smul.u32 16, %s13
        %p232 = scmp.lt.s32.totalorder %s231, 31
        %s233 = scalar_select %p232, %s231, 31
        %s234 = smul.addr %s233, 4
        %s235 = scalar_lea.vmem %s0, %s234
        %s236 = smul.u32 16, %s13
      $region44: #{tpu_custom_call.1} parent=39 // pred_fallthru
        _
    $region40: #{tpu_custom_call.1} parent=5 // pred_fallthru
      _
    %p237 = scmp.le.s32.totalorder 1, %s13
    %p238 = scmp.lt.s32.totalorder %s13, 3
    %p239 = pnand %p237, %p238
    %p240 = pneg %p239
    // Predicated region
    $region45: #{tpu_custom_call.1} parent=5 // pred_check
      _
    $region46: #{tpu_custom_call.1} parent=5 // pred_check_branch
      %242 = sbr.rel (%p239) target = $region48
    $region47: #{tpu_custom_call.1} parent=5 // pred_region
      %s243 = ssub.s32 %s13, 1
      %s244 = smul.u32 16, %s18
      %p245 = scmp.lt.s32.totalorder %s244, 31
      %s246 = scalar_select %p245, %s244, 31
      %s247 = smul.addr %s246, 4
      %s248 = scalar_lea.vmem %s0, %s247
      %p249 = pneg %p39
      %p250 = pneg %p36
      %p251 = pneg %p60
      %p252 = pneg %p57
      %p253 = pneg %p81
      %p254 = pneg %p78
      %p255 = pneg %p102
      %p256 = pneg %p99
      %p257 = pneg %p123
      %p258 = pneg %p120
      %p259 = pneg %p144
      %p260 = pneg %p141
      %p261 = pneg %p165
      %p262 = pneg %p162
      %p263 = pneg %p191
      %p264 = pneg %p188
      %s265 = smul.u32 16, %s18
      %p266 = scmp.lt.s32.totalorder %s265, 31
      %s267 = scalar_select %p266, %s265, 31
      %s268 = smul.addr %s267, 8
      %s269 = scalar_lea.vmem %s7, %s268
      %s270 = smul.u32 16, %s18
      %p271 = scmp.lt.s32.totalorder %s270, 31
      %s272 = scalar_select %p271, %s270, 31
      %s273 = smul.addr %s272, 4
      %s274 = scalar_lea.vmem %s0, %s273
      %s275 = smul.u32 16, %s18
      %s276 = smul.u32 16, %s18
      %p277 = scmp.lt.s32.totalorder %s276, 31
      %s278 = scalar_select %p277, %s276, 31
      %s279 = smul.addr %s278, 8
      %s280 = scalar_lea.vmem %s7, %s279
      %s281 = smul.u32 16, %s18
      %v283 = vld [vmem:[%s274] sm:$0xf]
      %v284 = vld [vmem:[%s274 + $0x4] sm:$0xf]
      %v285 = vld [vmem:[%s274 + $0x8] sm:$0xf]
      %v286 = vld [vmem:[%s274 + $0xc] sm:$0xf]
      %v287 = vld [vmem:[%s274 + $0x10] sm:$0xf]
      %v288 = vld [vmem:[%s274 + $0x14] sm:$0xf]
      %v289 = vld [vmem:[%s274 + $0x18] sm:$0xf]
      %v290 = vld [vmem:[%s274 + $0x1c] sm:$0xf]
      %v291 = vld [vmem:[%s274 + $0x20] sm:$0xf]
      %v292 = vld [vmem:[%s274 + $0x24] sm:$0xf]
      %v293 = vld [vmem:[%s274 + $0x28] sm:$0xf]
      %v294 = vld [vmem:[%s274 + $0x2c] sm:$0xf]
      %v295 = vld [vmem:[%s274 + $0x30] sm:$0xf]
      %v296 = vld [vmem:[%s274 + $0x34] sm:$0xf]
      %v297 = vld [vmem:[%s274 + $0x38] sm:$0xf]
      %v298 = vld [vmem:[%s274 + $0x3c] sm:$0xf]
      %v299 = vld [vmem:[%s1] sm:$0xf]
      %v300 = vld [vmem:[%s1 + $0x4] sm:$0xf]
      %v301 = vld [vmem:[%s2] sm:$0x1]
      %v303 = vlaneseq
      %v304 = vshrl.u32 %v303, 7
      %v305 = vsub.s32 0, %v304
      %v306 = vrot.slane %v301, %v305
      %v324 = vunpack.c.l.b16 %v283
      %v325 = vunpack.c.l.b16 %v284
      %v326 = vunpack.c.l.b16 %v285
      %v327 = vunpack.c.l.b16 %v286
      %v328 = vunpack.c.l.b16 %v287
      %v329 = vunpack.c.l.b16 %v288
      %v330 = vunpack.c.l.b16 %v289
      %v331 = vunpack.c.l.b16 %v290
      %v332 = vunpack.c.l.b16 %v291
      %v333 = vunpack.c.l.b16 %v292
      %v334 = vunpack.c.l.b16 %v293
      %v335 = vunpack.c.l.b16 %v294
      %v336 = vunpack.c.l.b16 %v295
      %v337 = vunpack.c.l.b16 %v296
      %v338 = vunpack.c.l.b16 %v297
      %v339 = vunpack.c.l.b16 %v298
      %v340 = vpack.c.b16 %v325, %v324
      %v341 = vpack.c.b16 %v327, %v326
      %v342 = vpack.c.b16 %v329, %v328
      %v343 = vpack.c.b16 %v331, %v330
      %v344 = vpack.c.b16 %v333, %v332
      %v345 = vpack.c.b16 %v335, %v334
      %v346 = vpack.c.b16 %v337, %v336
      %v347 = vpack.c.b16 %v339, %v338
      %v350 = vunpack.c.l.b16 %v299
      %v351 = vunpack.c.l.b16 %v300
      %v352 = vpack.c.b16 %v351, %v350
      %vm354 = vcmask 130048
      %v356 = vsel %vm354, %v340, 0
      %v359 = vsel %vm354, %v341, 0
      %v362 = vsel %vm354, %v342, 0
      %v365 = vsel %vm354, %v343, 0
      %v368 = vsel %vm354, %v344, 0
      %v371 = vsel %vm354, %v345, 0
      %v374 = vsel %vm354, %v346, 0
      %v377 = vsel %vm354, %v347, 0
      %379 = vmatprep.subr.bf16.mxu0 0
      %380 = vmatpush1.bf16.msra.mxu0 0
      %381 = vmatprep.subr.bf16.mxu0 0
      %382 = vmatpush1.bf16.msra.mxu0 0
      %383 = vmatprep.subr.bf16.mxu0 0
      %384 = vmatpush1.bf16.msra.mxu0 0
      %385 = vmatprep.subr.bf16.mxu0 0
      %386 = vmatpush1.bf16.msra.mxu0 0
      %387 = vmatprep.subr.bf16.mxu0 0
      %388 = vmatpush1.bf16.msra.mxu0 0
      %389 = vmatprep.subr.bf16.mxu0 0
      %390 = vmatpush1.bf16.msra.mxu0 0
      %391 = vmatprep.subr.bf16.mxu0 0
      %392 = vmatpush1.bf16.msra.mxu0 0
      %393 = vmatprep.subr.bf16.mxu0 0
      %394 = vmatpush1.bf16.msra.mxu0 %v352
      %395 = vmatprep.subr.bf16.mxu0 0
      %396 = vmatpush2.bf16.msra.mxu0 0
      %397 = vmatprep.subr.bf16.mxu0 0
      %398 = vmatpush2.bf16.msra.mxu0 0
      %399 = vmatprep.subr.bf16.mxu0 0
      %400 = vmatpush2.bf16.msra.mxu0 0
      %401 = vmatprep.subr.bf16.mxu0 0
      %402 = vmatpush2.bf16.msra.mxu0 0
      %403 = vmatprep.subr.bf16.mxu0 0
      %404 = vmatpush2.bf16.msra.mxu0 0
      %405 = vmatprep.subr.bf16.mxu0 0
      %406 = vmatpush2.bf16.msra.mxu0 0
      %407 = vmatprep.subr.bf16.mxu0 0
      %408 = vmatpush2.bf16.msra.mxu0 0
      %409 = vmatprep.subr.bf16.mxu0 0
      %410 = vmatpush2.bf16.msra.mxu0 0
      %411 = vmatprep.mubr.bf16.mxu0 0
      %412 = vmatmul.mubr.bf16.gmra.mxu0 %v356
      %v413 = vpop.f32.mrf.mxu0
      %v414 = vadd.f32 %v306, %v413
      %v415 = vpop.f32.mrf.mxu0
      %v416 = vpop.f32.mrf.mxu0
      %v417 = vadd.f32 %v306, %v416
      %v418 = vpop.f32.mrf.mxu0
      %419 = vmatprep.mubr.bf16.mxu0 0
      %420 = vmatmul.mubr.bf16.gmra.mxu0 %v359
      %v421 = vpop.f32.mrf.mxu0
      %v422 = vadd.f32 %v306, %v421
      %v423 = vpop.f32.mrf.mxu0
      %v424 = vpop.f32.mrf.mxu0
      %v425 = vadd.f32 %v306, %v424
      %v426 = vpop.f32.mrf.mxu0
      %427 = vmatprep.mubr.bf16.mxu0 0
      %428 = vmatmul.mubr.bf16.gmra.mxu0 %v362
      %v429 = vpop.f32.mrf.mxu0
      %v430 = vadd.f32 %v306, %v429
      %v431 = vpop.f32.mrf.mxu0
      %v432 = vpop.f32.mrf.mxu0
      %v433 = vadd.f32 %v306, %v432
      %v434 = vpop.f32.mrf.mxu0
      %435 = vmatprep.mubr.bf16.mxu0 0
      %436 = vmatmul.mubr.bf16.gmra.mxu0 %v365
      %v437 = vpop.f32.mrf.mxu0
      %v438 = vadd.f32 %v306, %v437
      %v439 = vpop.f32.mrf.mxu0
      %v440 = vpop.f32.mrf.mxu0
      %v441 = vadd.f32 %v306, %v440
      %v442 = vpop.f32.mrf.mxu0
      %443 = vmatprep.mubr.bf16.mxu0 0
      %444 = vmatmul.mubr.bf16.gmra.mxu0 %v368
      %v445 = vpop.f32.mrf.mxu0
      %v446 = vadd.f32 %v306, %v445
      %v447 = vpop.f32.mrf.mxu0
      %v448 = vpop.f32.mrf.mxu0
      %v449 = vadd.f32 %v306, %v448
      %v450 = vpop.f32.mrf.mxu0
      %451 = vmatprep.mubr.bf16.mxu0 0
      %452 = vmatmul.mubr.bf16.gmra.mxu0 %v371
      %v453 = vpop.f32.mrf.mxu0
      %v454 = vadd.f32 %v306, %v453
      %v455 = vpop.f32.mrf.mxu0
      %v456 = vpop.f32.mrf.mxu0
      %v457 = vadd.f32 %v306, %v456
      %v458 = vpop.f32.mrf.mxu0
      %459 = vmatprep.mubr.bf16.mxu0 0
      %460 = vmatmul.mubr.bf16.gmra.mxu0 %v374
      %v461 = vpop.f32.mrf.mxu0
      %v462 = vadd.f32 %v306, %v461
      %v463 = vpop.f32.mrf.mxu0
      %v464 = vpop.f32.mrf.mxu0
      %v465 = vadd.f32 %v306, %v464
      %v466 = vpop.f32.mrf.mxu0
      %467 = vmatprep.mubr.bf16.mxu0 0
      %468 = vmatmul.mubr.bf16.gmra.mxu0 %v377
      %v469 = vpop.f32.mrf.mxu0
      %v470 = vadd.f32 %v306, %v469
      %v471 = vpop.f32.mrf.mxu0
      %v472 = vpop.f32.mrf.mxu0
      %v473 = vadd.f32 %v306, %v472
      %v474 = vpop.f32.mrf.mxu0
      %475 = vdwg.mxu0
      %vm476 = vcmp.gt.f32.partialorder %v414, 20.0
      %vm477 = vcmp.gt.f32.partialorder %v417, 20.0
      %vm478 = vcmp.gt.f32.partialorder %v422, 20.0
      %vm479 = vcmp.gt.f32.partialorder %v425, 20.0
      %vm480 = vcmp.gt.f32.partialorder %v430, 20.0
      %vm481 = vcmp.gt.f32.partialorder %v433, 20.0
      %vm482 = vcmp.gt.f32.partialorder %v438, 20.0
      %vm483 = vcmp.gt.f32.partialorder %v441, 20.0
      %vm484 = vcmp.gt.f32.partialorder %v446, 20.0
      %vm485 = vcmp.gt.f32.partialorder %v449, 20.0
      %vm486 = vcmp.gt.f32.partialorder %v454, 20.0
      %vm487 = vcmp.gt.f32.partialorder %v457, 20.0
      %vm488 = vcmp.gt.f32.partialorder %v462, 20.0
      %vm489 = vcmp.gt.f32.partialorder %v465, 20.0
      %vm490 = vcmp.gt.f32.partialorder %v470, 20.0
      %vm491 = vcmp.gt.f32.partialorder %v473, 20.0
      %v492 = vmul.f32 %v414, 1.442695
      %v493 = vpow.pop %v492
      %v494 = vmul.f32 %v417, 1.442695
      %v495 = vpow.pop %v494
      %v496 = vmul.f32 %v422, 1.442695
      %v497 = vpow.pop %v496
      %v498 = vmul.f32 %v425, 1.442695
      %v499 = vpow.pop %v498
      %v500 = vmul.f32 %v430, 1.442695
      %v501 = vpow.pop %v500
      %v502 = vmul.f32 %v433, 1.442695
      %v503 = vpow.pop %v502
      %v504 = vmul.f32 %v438, 1.442695
      %v505 = vpow.pop %v504
      %v506 = vmul.f32 %v441, 1.442695
      %v507 = vpow.pop %v506
      %v508 = vmul.f32 %v446, 1.442695
      %v509 = vpow.pop %v508
      %v510 = vmul.f32 %v449, 1.442695
      %v511 = vpow.pop %v510
      %v512 = vmul.f32 %v454, 1.442695
      %v513 = vpow.pop %v512
      %v514 = vmul.f32 %v457, 1.442695
      %v515 = vpow.pop %v514
      %v516 = vmul.f32 %v462, 1.442695
      %v517 = vpow.pop %v516
      %v518 = vmul.f32 %v465, 1.442695
      %v519 = vpow.pop %v518
      %v520 = vmul.f32 %v470, 1.442695
      %v521 = vpow.pop %v520
      %v522 = vmul.f32 %v473, 1.442695
      %v523 = vpow.pop %v522
      %v524 = vadd.f32 %v493, 1.0
      %v525 = vlog2.pop %v524
      %v526 = vmul.f32 %v525, 0.6931472
      %v527 = vmul.f32 -0.5, %v493
      %v528 = vadd.f32 %v527, 1.0
      %v529 = vmul.f32 %v528, %v493
      %v530 = vand.u32 2147483647, %v493
      %vm531 = vcmp.lt.f32.partialorder %v530, 0.0004427343
      %v532 = vsel %vm531, %v529, %v526
      %v533 = vadd.f32 %v495, 1.0
      %v534 = vlog2.pop %v533
      %v535 = vmul.f32 %v534, 0.6931472
      %v536 = vmul.f32 -0.5, %v495
      %v537 = vadd.f32 %v536, 1.0
      %v538 = vmul.f32 %v537, %v495
      %v539 = vand.u32 2147483647, %v495
      %vm540 = vcmp.lt.f32.partialorder %v539, 0.0004427343
      %v541 = vsel %vm540, %v538, %v535
      %v542 = vadd.f32 %v497, 1.0
      %v543 = vlog2.pop %v542
      %v544 = vmul.f32 %v543, 0.6931472
      %v545 = vmul.f32 -0.5, %v497
      %v546 = vadd.f32 %v545, 1.0
      %v547 = vmul.f32 %v546, %v497
      %v548 = vand.u32 2147483647, %v497
      %vm549 = vcmp.lt.f32.partialorder %v548, 0.0004427343
      %v550 = vsel %vm549, %v547, %v544
      %v551 = vadd.f32 %v499, 1.0
      %v552 = vlog2.pop %v551
      %v553 = vmul.f32 %v552, 0.6931472
      %v554 = vmul.f32 -0.5, %v499
      %v555 = vadd.f32 %v554, 1.0
      %v556 = vmul.f32 %v555, %v499
      %v557 = vand.u32 2147483647, %v499
      %vm558 = vcmp.lt.f32.partialorder %v557, 0.0004427343
      %v559 = vsel %vm558, %v556, %v553
      %v560 = vadd.f32 %v501, 1.0
      %v561 = vlog2.pop %v560
      %v562 = vmul.f32 %v561, 0.6931472
      %v563 = vmul.f32 -0.5, %v501
      %v564 = vadd.f32 %v563, 1.0
      %v565 = vmul.f32 %v564, %v501
      %v566 = vand.u32 2147483647, %v501
      %vm567 = vcmp.lt.f32.partialorder %v566, 0.0004427343
      %v568 = vsel %vm567, %v565, %v562
      %v569 = vadd.f32 %v503, 1.0
      %v570 = vlog2.pop %v569
      %v571 = vmul.f32 %v570, 0.6931472
      %v572 = vmul.f32 -0.5, %v503
      %v573 = vadd.f32 %v572, 1.0
      %v574 = vmul.f32 %v573, %v503
      %v575 = vand.u32 2147483647, %v503
      %vm576 = vcmp.lt.f32.partialorder %v575, 0.0004427343
      %v577 = vsel %vm576, %v574, %v571
      %v578 = vadd.f32 %v505, 1.0
      %v579 = vlog2.pop %v578
      %v580 = vmul.f32 %v579, 0.6931472
      %v581 = vmul.f32 -0.5, %v505
      %v582 = vadd.f32 %v581, 1.0
      %v583 = vmul.f32 %v582, %v505
      %v584 = vand.u32 2147483647, %v505
      %vm585 = vcmp.lt.f32.partialorder %v584, 0.0004427343
      %v586 = vsel %vm585, %v583, %v580
      %v587 = vadd.f32 %v507, 1.0
      %v588 = vlog2.pop %v587
      %v589 = vmul.f32 %v588, 0.6931472
      %v590 = vmul.f32 -0.5, %v507
      %v591 = vadd.f32 %v590, 1.0
      %v592 = vmul.f32 %v591, %v507
      %v593 = vand.u32 2147483647, %v507
      %vm594 = vcmp.lt.f32.partialorder %v593, 0.0004427343
      %v595 = vsel %vm594, %v592, %v589
      %v596 = vadd.f32 %v509, 1.0
      %v597 = vlog2.pop %v596
      %v598 = vmul.f32 %v597, 0.6931472
      %v599 = vmul.f32 -0.5, %v509
      %v600 = vadd.f32 %v599, 1.0
      %v601 = vmul.f32 %v600, %v509
      %v602 = vand.u32 2147483647, %v509
      %vm603 = vcmp.lt.f32.partialorder %v602, 0.0004427343
      %v604 = vsel %vm603, %v601, %v598
      %v605 = vadd.f32 %v511, 1.0
      %v606 = vlog2.pop %v605
      %v607 = vmul.f32 %v606, 0.6931472
      %v608 = vmul.f32 -0.5, %v511
      %v609 = vadd.f32 %v608, 1.0
      %v610 = vmul.f32 %v609, %v511
      %v611 = vand.u32 2147483647, %v511
      %vm612 = vcmp.lt.f32.partialorder %v611, 0.0004427343
      %v613 = vsel %vm612, %v610, %v607
      %v614 = vadd.f32 %v513, 1.0
      %v615 = vlog2.pop %v614
      %v616 = vmul.f32 %v615, 0.6931472
      %v617 = vmul.f32 -0.5, %v513
      %v618 = vadd.f32 %v617, 1.0
      %v619 = vmul.f32 %v618, %v513
      %v620 = vand.u32 2147483647, %v513
      %vm621 = vcmp.lt.f32.partialorder %v620, 0.0004427343
      %v622 = vsel %vm621, %v619, %v616
      %v623 = vadd.f32 %v515, 1.0
      %v624 = vlog2.pop %v623
      %v625 = vmul.f32 %v624, 0.6931472
      %v626 = vmul.f32 -0.5, %v515
      %v627 = vadd.f32 %v626, 1.0
      %v628 = vmul.f32 %v627, %v515
      %v629 = vand.u32 2147483647, %v515
      %vm630 = vcmp.lt.f32.partialorder %v629, 0.0004427343
      %v631 = vsel %vm630, %v628, %v625
      %v632 = vadd.f32 %v517, 1.0
      %v633 = vlog2.pop %v632
      %v634 = vmul.f32 %v633, 0.6931472
      %v635 = vmul.f32 -0.5, %v517
      %v636 = vadd.f32 %v635, 1.0
      %v637 = vmul.f32 %v636, %v517
      %v638 = vand.u32 2147483647, %v517
      %vm639 = vcmp.lt.f32.partialorder %v638, 0.0004427343
      %v640 = vsel %vm639, %v637, %v634
      %v641 = vadd.f32 %v519, 1.0
      %v642 = vlog2.pop %v641
      %v643 = vmul.f32 %v642, 0.6931472
      %v644 = vmul.f32 -0.5, %v519
      %v645 = vadd.f32 %v644, 1.0
      %v646 = vmul.f32 %v645, %v519
      %v647 = vand.u32 2147483647, %v519
      %vm648 = vcmp.lt.f32.partialorder %v647, 0.0004427343
      %v649 = vsel %vm648, %v646, %v643
      %v650 = vadd.f32 %v521, 1.0
      %v651 = vlog2.pop %v650
      %v652 = vmul.f32 %v651, 0.6931472
      %v653 = vmul.f32 -0.5, %v521
      %v654 = vadd.f32 %v653, 1.0
      %v655 = vmul.f32 %v654, %v521
      %v656 = vand.u32 2147483647, %v521
      %vm657 = vcmp.lt.f32.partialorder %v656, 0.0004427343
      %v658 = vsel %vm657, %v655, %v652
      %v659 = vadd.f32 %v523, 1.0
      %v660 = vlog2.pop %v659
      %v661 = vmul.f32 %v660, 0.6931472
      %v662 = vmul.f32 -0.5, %v523
      %v663 = vadd.f32 %v662, 1.0
      %v664 = vmul.f32 %v663, %v523
      %v665 = vand.u32 2147483647, %v523
      %vm666 = vcmp.lt.f32.partialorder %v665, 0.0004427343
      %v667 = vsel %vm666, %v664, %v661
      %v668 = vsel %vm476, %v414, %v532
      %v669 = vsel %vm477, %v417, %v541
      %v670 = vsel %vm478, %v422, %v550
      %v671 = vsel %vm479, %v425, %v559
      %v672 = vsel %vm480, %v430, %v568
      %v673 = vsel %vm481, %v433, %v577
      %v674 = vsel %vm482, %v438, %v586
      %v675 = vsel %vm483, %v441, %v595
      %v676 = vsel %vm484, %v446, %v604
      %v677 = vsel %vm485, %v449, %v613
      %v678 = vsel %vm486, %v454, %v622
      %v679 = vsel %vm487, %v457, %v631
      %v680 = vsel %vm488, %v462, %v640
      %v681 = vsel %vm489, %v465, %v649
      %v682 = vsel %vm490, %v470, %v658
      %v683 = vsel %vm491, %v473, %v667
      %v684 = vpack.c.bf16 %v669, %v668
      %v685 = vpack.c.bf16 %v671, %v670
      %v686 = vpack.c.bf16 %v673, %v672
      %v687 = vpack.c.bf16 %v675, %v674
      %v688 = vpack.c.bf16 %v677, %v676
      %v689 = vpack.c.bf16 %v679, %v678
      %v690 = vpack.c.bf16 %v681, %v680
      %v691 = vpack.c.bf16 %v683, %v682
      %v692 = vld [vmem:[%s3] sm:$0xf]
      %v693 = vld [vmem:[%s3 + $0x4] sm:$0xf]
      %v694 = vld [vmem:[%s3 + $0x8] sm:$0xf]
      %v695 = vld [vmem:[%s3 + $0xc] sm:$0xf]
      %v696 = vld [vmem:[%s4] sm:$0x1]
      %v698 = vlaneseq
      %v699 = vshrl.u32 %v698, 7
      %v700 = vsub.s32 0, %v699
      %v701 = vrot.slane %v696, %v700
      %v707 = vunpack.c.l.b16 %v692
      %v708 = vunpack.c.l.b16 %v693
      %v709 = vunpack.c.l.b16 %v694
      %v710 = vunpack.c.l.b16 %v695
      %v711 = vpack.c.b16 %v708, %v707
      %v712 = vpack.c.b16 %v710, %v709
      %vm715 = vcmask 261120
      %v717 = vsel %vm715, %v684, 0
      %v720 = vsel %vm715, %v685, 0
      %v723 = vsel %vm715, %v686, 0
      %v726 = vsel %vm715, %v687, 0
      %v729 = vsel %vm715, %v688, 0
      %v732 = vsel %vm715, %v689, 0
      %v735 = vsel %vm715, %v690, 0
      %v738 = vsel %vm715, %v691, 0
      %740 = vmatprep.subr.bf16.mxu0 0
      %741 = vmatpush1.bf16.msra.mxu0 0
      %742 = vmatprep.subr.bf16.mxu0 0
      %743 = vmatpush1.bf16.msra.mxu0 0
      %744 = vmatprep.subr.bf16.mxu0 0
      %745 = vmatpush1.bf16.msra.mxu0 0
      %746 = vmatprep.subr.bf16.mxu0 0
      %747 = vmatpush1.bf16.msra.mxu0 0
      %748 = vmatprep.subr.bf16.mxu0 0
      %749 = vmatpush1.bf16.msra.mxu0 0
      %750 = vmatprep.subr.bf16.mxu0 0
      %751 = vmatpush1.bf16.msra.mxu0 0
      %752 = vmatprep.subr.bf16.mxu0 0
      %753 = vmatpush1.bf16.msra.mxu0 %v712
      %754 = vmatprep.subr.bf16.mxu0 0
      %755 = vmatpush1.bf16.msra.mxu0 %v711
      %756 = vmatprep.subr.bf16.mxu0 0
      %757 = vmatpush2.bf16.msra.mxu0 0
      %758 = vmatprep.subr.bf16.mxu0 0
      %759 = vmatpush2.bf16.msra.mxu0 0
      %760 = vmatprep.subr.bf16.mxu0 0
      %761 = vmatpush2.bf16.msra.mxu0 0
      %762 = vmatprep.subr.bf16.mxu0 0
      %763 = vmatpush2.bf16.msra.mxu0 0
      %764 = vmatprep.subr.bf16.mxu0 0
      %765 = vmatpush2.bf16.msra.mxu0 0
      %766 = vmatprep.subr.bf16.mxu0 0
      %767 = vmatpush2.bf16.msra.mxu0 0
      %768 = vmatprep.subr.bf16.mxu0 0
      %769 = vmatpush2.bf16.msra.mxu0 0
      %770 = vmatprep.subr.bf16.mxu0 0
      %771 = vmatpush2.bf16.msra.mxu0 0
      %772 = vmatprep.mubr.bf16.mxu0 0
      %773 = vmatmul.mubr.bf16.gmra.mxu0 %v717
      %v774 = vpop.f32.mrf.mxu0
      %v775 = vadd.f32 %v701, %v774
      %v776 = vpop.f32.mrf.mxu0
      %v777 = vpop.f32.mrf.mxu0
      %v778 = vadd.f32 %v701, %v777
      %v779 = vpop.f32.mrf.mxu0
      %780 = vmatprep.mubr.bf16.mxu0 0
      %781 = vmatmul.mubr.bf16.gmra.mxu0 %v720
      %v782 = vpop.f32.mrf.mxu0
      %v783 = vadd.f32 %v701, %v782
      %v784 = vpop.f32.mrf.mxu0
      %v785 = vpop.f32.mrf.mxu0
      %v786 = vadd.f32 %v701, %v785
      %v787 = vpop.f32.mrf.mxu0
      %788 = vmatprep.mubr.bf16.mxu0 0
      %789 = vmatmul.mubr.bf16.gmra.mxu0 %v723
      %v790 = vpop.f32.mrf.mxu0
      %v791 = vadd.f32 %v701, %v790
      %v792 = vpop.f32.mrf.mxu0
      %v793 = vpop.f32.mrf.mxu0
      %v794 = vadd.f32 %v701, %v793
      %v795 = vpop.f32.mrf.mxu0
      %796 = vmatprep.mubr.bf16.mxu0 0
      %797 = vmatmul.mubr.bf16.gmra.mxu0 %v726
      %v798 = vpop.f32.mrf.mxu0
      %v799 = vadd.f32 %v701, %v798
      %v800 = vpop.f32.mrf.mxu0
      %v801 = vpop.f32.mrf.mxu0
      %v802 = vadd.f32 %v701, %v801
      %v803 = vpop.f32.mrf.mxu0
      %804 = vmatprep.mubr.bf16.mxu0 0
      %805 = vmatmul.mubr.bf16.gmra.mxu0 %v729
      %v806 = vpop.f32.mrf.mxu0
      %v807 = vadd.f32 %v701, %v806
      %v808 = vpop.f32.mrf.mxu0
      %v809 = vpop.f32.mrf.mxu0
      %v810 = vadd.f32 %v701, %v809
      %v811 = vpop.f32.mrf.mxu0
      %812 = vmatprep.mubr.bf16.mxu0 0
      %813 = vmatmul.mubr.bf16.gmra.mxu0 %v732
      %v814 = vpop.f32.mrf.mxu0
      %v815 = vadd.f32 %v701, %v814
      %v816 = vpop.f32.mrf.mxu0
      %v817 = vpop.f32.mrf.mxu0
      %v818 = vadd.f32 %v701, %v817
      %v819 = vpop.f32.mrf.mxu0
      %820 = vmatprep.mubr.bf16.mxu0 0
      %821 = vmatmul.mubr.bf16.gmra.mxu0 %v735
      %v822 = vpop.f32.mrf.mxu0
      %v823 = vadd.f32 %v701, %v822
      %v824 = vpop.f32.mrf.mxu0
      %v825 = vpop.f32.mrf.mxu0
      %v826 = vadd.f32 %v701, %v825
      %v827 = vpop.f32.mrf.mxu0
      %828 = vmatprep.mubr.bf16.mxu0 0
      %829 = vmatmul.mubr.bf16.gmra.mxu0 %v738
      %v830 = vpop.f32.mrf.mxu0
      %v831 = vadd.f32 %v701, %v830
      %v832 = vpop.f32.mrf.mxu0
      %v833 = vpop.f32.mrf.mxu0
      %v834 = vadd.f32 %v701, %v833
      %v835 = vpop.f32.mrf.mxu0
      %836 = vdwg.mxu0
      %vm837 = vcmp.gt.f32.partialorder %v775, 20.0
      %vm838 = vcmp.gt.f32.partialorder %v778, 20.0
      %vm839 = vcmp.gt.f32.partialorder %v783, 20.0
      %vm840 = vcmp.gt.f32.partialorder %v786, 20.0
      %vm841 = vcmp.gt.f32.partialorder %v791, 20.0
      %vm842 = vcmp.gt.f32.partialorder %v794, 20.0
      %vm843 = vcmp.gt.f32.partialorder %v799, 20.0
      %vm844 = vcmp.gt.f32.partialorder %v802, 20.0
      %vm845 = vcmp.gt.f32.partialorder %v807, 20.0
      %vm846 = vcmp.gt.f32.partialorder %v810, 20.0
      %vm847 = vcmp.gt.f32.partialorder %v815, 20.0
      %vm848 = vcmp.gt.f32.partialorder %v818, 20.0
      %vm849 = vcmp.gt.f32.partialorder %v823, 20.0
      %vm850 = vcmp.gt.f32.partialorder %v826, 20.0
      %vm851 = vcmp.gt.f32.partialorder %v831, 20.0
      %vm852 = vcmp.gt.f32.partialorder %v834, 20.0
      %v853 = vmul.f32 %v775, 1.442695
      %v854 = vpow.pop %v853
      %v855 = vmul.f32 %v778, 1.442695
      %v856 = vpow.pop %v855
      %v857 = vmul.f32 %v783, 1.442695
      %v858 = vpow.pop %v857
      %v859 = vmul.f32 %v786, 1.442695
      %v860 = vpow.pop %v859
      %v861 = vmul.f32 %v791, 1.442695
      %v862 = vpow.pop %v861
      %v863 = vmul.f32 %v794, 1.442695
      %v864 = vpow.pop %v863
      %v865 = vmul.f32 %v799, 1.442695
      %v866 = vpow.pop %v865
      %v867 = vmul.f32 %v802, 1.442695
      %v868 = vpow.pop %v867
      %v869 = vmul.f32 %v807, 1.442695
      %v870 = vpow.pop %v869
      %v871 = vmul.f32 %v810, 1.442695
      %v872 = vpow.pop %v871
      %v873 = vmul.f32 %v815, 1.442695
      %v874 = vpow.pop %v873
      %v875 = vmul.f32 %v818, 1.442695
      %v876 = vpow.pop %v875
      %v877 = vmul.f32 %v823, 1.442695
      %v878 = vpow.pop %v877
      %v879 = vmul.f32 %v826, 1.442695
      %v880 = vpow.pop %v879
      %v881 = vmul.f32 %v831, 1.442695
      %v882 = vpow.pop %v881
      %v883 = vmul.f32 %v834, 1.442695
      %v884 = vpow.pop %v883
      %v885 = vadd.f32 %v854, 1.0
      %v886 = vlog2.pop %v885
      %v887 = vmul.f32 %v886, 0.6931472
      %v888 = vmul.f32 -0.5, %v854
      %v889 = vadd.f32 %v888, 1.0
      %v890 = vmul.f32 %v889, %v854
      %v891 = vand.u32 2147483647, %v854
      %vm892 = vcmp.lt.f32.partialorder %v891, 0.0004427343
      %v893 = vsel %vm892, %v890, %v887
      %v894 = vadd.f32 %v856, 1.0
      %v895 = vlog2.pop %v894
      %v896 = vmul.f32 %v895, 0.6931472
      %v897 = vmul.f32 -0.5, %v856
      %v898 = vadd.f32 %v897, 1.0
      %v899 = vmul.f32 %v898, %v856
      %v900 = vand.u32 2147483647, %v856
      %vm901 = vcmp.lt.f32.partialorder %v900, 0.0004427343
      %v902 = vsel %vm901, %v899, %v896
      %v903 = vadd.f32 %v858, 1.0
      %v904 = vlog2.pop %v903
      %v905 = vmul.f32 %v904, 0.6931472
      %v906 = vmul.f32 -0.5, %v858
      %v907 = vadd.f32 %v906, 1.0
      %v908 = vmul.f32 %v907, %v858
      %v909 = vand.u32 2147483647, %v858
      %vm910 = vcmp.lt.f32.partialorder %v909, 0.0004427343
      %v911 = vsel %vm910, %v908, %v905
      %v912 = vadd.f32 %v860, 1.0
      %v913 = vlog2.pop %v912
      %v914 = vmul.f32 %v913, 0.6931472
      %v915 = vmul.f32 -0.5, %v860
      %v916 = vadd.f32 %v915, 1.0
      %v917 = vmul.f32 %v916, %v860
      %v918 = vand.u32 2147483647, %v860
      %vm919 = vcmp.lt.f32.partialorder %v918, 0.0004427343
      %v920 = vsel %vm919, %v917, %v914
      %v921 = vadd.f32 %v862, 1.0
      %v922 = vlog2.pop %v921
      %v923 = vmul.f32 %v922, 0.6931472
      %v924 = vmul.f32 -0.5, %v862
      %v925 = vadd.f32 %v924, 1.0
      %v926 = vmul.f32 %v925, %v862
      %v927 = vand.u32 2147483647, %v862
      %vm928 = vcmp.lt.f32.partialorder %v927, 0.0004427343
      %v929 = vsel %vm928, %v926, %v923
      %v930 = vadd.f32 %v864, 1.0
      %v931 = vlog2.pop %v930
      %v932 = vmul.f32 %v931, 0.6931472
      %v933 = vmul.f32 -0.5, %v864
      %v934 = vadd.f32 %v933, 1.0
      %v935 = vmul.f32 %v934, %v864
      %v936 = vand.u32 2147483647, %v864
      %vm937 = vcmp.lt.f32.partialorder %v936, 0.0004427343
      %v938 = vsel %vm937, %v935, %v932
      %v939 = vadd.f32 %v866, 1.0
      %v940 = vlog2.pop %v939
      %v941 = vmul.f32 %v940, 0.6931472
      %v942 = vmul.f32 -0.5, %v866
      %v943 = vadd.f32 %v942, 1.0
      %v944 = vmul.f32 %v943, %v866
      %v945 = vand.u32 2147483647, %v866
      %vm946 = vcmp.lt.f32.partialorder %v945, 0.0004427343
      %v947 = vsel %vm946, %v944, %v941
      %v948 = vadd.f32 %v868, 1.0
      %v949 = vlog2.pop %v948
      %v950 = vmul.f32 %v949, 0.6931472
      %v951 = vmul.f32 -0.5, %v868
      %v952 = vadd.f32 %v951, 1.0
      %v953 = vmul.f32 %v952, %v868
      %v954 = vand.u32 2147483647, %v868
      %vm955 = vcmp.lt.f32.partialorder %v954, 0.0004427343
      %v956 = vsel %vm955, %v953, %v950
      %v957 = vadd.f32 %v870, 1.0
      %v958 = vlog2.pop %v957
      %v959 = vmul.f32 %v958, 0.6931472
      %v960 = vmul.f32 -0.5, %v870
      %v961 = vadd.f32 %v960, 1.0
      %v962 = vmul.f32 %v961, %v870
      %v963 = vand.u32 2147483647, %v870
      %vm964 = vcmp.lt.f32.partialorder %v963, 0.0004427343
      %v965 = vsel %vm964, %v962, %v959
      %v966 = vadd.f32 %v872, 1.0
      %v967 = vlog2.pop %v966
      %v968 = vmul.f32 %v967, 0.6931472
      %v969 = vmul.f32 -0.5, %v872
      %v970 = vadd.f32 %v969, 1.0
      %v971 = vmul.f32 %v970, %v872
      %v972 = vand.u32 2147483647, %v872
      %vm973 = vcmp.lt.f32.partialorder %v972, 0.0004427343
      %v974 = vsel %vm973, %v971, %v968
      %v975 = vadd.f32 %v874, 1.0
      %v976 = vlog2.pop %v975
      %v977 = vmul.f32 %v976, 0.6931472
      %v978 = vmul.f32 -0.5, %v874
      %v979 = vadd.f32 %v978, 1.0
      %v980 = vmul.f32 %v979, %v874
      %v981 = vand.u32 2147483647, %v874
      %vm982 = vcmp.lt.f32.partialorder %v981, 0.0004427343
      %v983 = vsel %vm982, %v980, %v977
      %v984 = vadd.f32 %v876, 1.0
      %v985 = vlog2.pop %v984
      %v986 = vmul.f32 %v985, 0.6931472
      %v987 = vmul.f32 -0.5, %v876
      %v988 = vadd.f32 %v987, 1.0
      %v989 = vmul.f32 %v988, %v876
      %v990 = vand.u32 2147483647, %v876
      %vm991 = vcmp.lt.f32.partialorder %v990, 0.0004427343
      %v992 = vsel %vm991, %v989, %v986
      %v993 = vadd.f32 %v878, 1.0
      %v994 = vlog2.pop %v993
      %v995 = vmul.f32 %v994, 0.6931472
      %v996 = vmul.f32 -0.5, %v878
      %v997 = vadd.f32 %v996, 1.0
      %v998 = vmul.f32 %v997, %v878
      %v999 = vand.u32 2147483647, %v878
      %vm1000 = vcmp.lt.f32.partialorder %v999, 0.0004427343
      %v1001 = vsel %vm1000, %v998, %v995
      %v1002 = vadd.f32 %v880, 1.0
      %v1003 = vlog2.pop %v1002
      %v1004 = vmul.f32 %v1003, 0.6931472
      %v1005 = vmul.f32 -0.5, %v880
      %v1006 = vadd.f32 %v1005, 1.0
      %v1007 = vmul.f32 %v1006, %v880
      %v1008 = vand.u32 2147483647, %v880
      %vm1009 = vcmp.lt.f32.partialorder %v1008, 0.0004427343
      %v1010 = vsel %vm1009, %v1007, %v1004
      %v1011 = vadd.f32 %v882, 1.0
      %v1012 = vlog2.pop %v1011
      %v1013 = vmul.f32 %v1012, 0.6931472
      %v1014 = vmul.f32 -0.5, %v882
      %v1015 = vadd.f32 %v1014, 1.0
      %v1016 = vmul.f32 %v1015, %v882
      %v1017 = vand.u32 2147483647, %v882
      %vm1018 = vcmp.lt.f32.partialorder %v1017, 0.0004427343
      %v1019 = vsel %vm1018, %v1016, %v1013
      %v1020 = vadd.f32 %v884, 1.0
      %v1021 = vlog2.pop %v1020
      %v1022 = vmul.f32 %v1021, 0.6931472
      %v1023 = vmul.f32 -0.5, %v884
      %v1024 = vadd.f32 %v1023, 1.0
      %v1025 = vmul.f32 %v1024, %v884
      %v1026 = vand.u32 2147483647, %v884
      %vm1027 = vcmp.lt.f32.partialorder %v1026, 0.0004427343
      %v1028 = vsel %vm1027, %v1025, %v1022
      %v1029 = vsel %vm837, %v775, %v893
      %v1030 = vsel %vm838, %v778, %v902
      %v1031 = vsel %vm839, %v783, %v911
      %v1032 = vsel %vm840, %v786, %v920
      %v1033 = vsel %vm841, %v791, %v929
      %v1034 = vsel %vm842, %v794, %v938
      %v1035 = vsel %vm843, %v799, %v947
      %v1036 = vsel %vm844, %v802, %v956
      %v1037 = vsel %vm845, %v807, %v965
      %v1038 = vsel %vm846, %v810, %v974
      %v1039 = vsel %vm847, %v815, %v983
      %v1040 = vsel %vm848, %v818, %v992
      %v1041 = vsel %vm849, %v823, %v1001
      %v1042 = vsel %vm850, %v826, %v1010
      %v1043 = vsel %vm851, %v831, %v1019
      %v1044 = vsel %vm852, %v834, %v1028
      %v1045 = vpack.c.bf16 %v1030, %v1029
      %v1046 = vpack.c.bf16 %v1032, %v1031
      %v1047 = vpack.c.bf16 %v1034, %v1033
      %v1048 = vpack.c.bf16 %v1036, %v1035
      %v1049 = vpack.c.bf16 %v1038, %v1037
      %v1050 = vpack.c.bf16 %v1040, %v1039
      %v1051 = vpack.c.bf16 %v1042, %v1041
      %v1052 = vpack.c.bf16 %v1044, %v1043
      %v1053 = vld [vmem:[%s5] sm:$0xf]
      %v1054 = vld [vmem:[%s5 + $0x4] sm:$0xf]
      %v1055 = vld [vmem:[%s5 + $0x8] sm:$0xf]
      %v1056 = vld [vmem:[%s5 + $0xc] sm:$0xf]
      %v1057 = vld [vmem:[%s5 + $0x10] sm:$0xf]
      %v1058 = vld [vmem:[%s5 + $0x14] sm:$0xf]
      %v1059 = vld [vmem:[%s5 + $0x18] sm:$0xf]
      %v1060 = vld [vmem:[%s5 + $0x1c] sm:$0xf]
      %v1061 = vld [vmem:[%s6] sm:$0x1]
      %v1063 = vlaneseq
      %v1064 = vshrl.u32 %v1063, 7
      %v1065 = vsub.s32 0, %v1064
      %v1066 = vrot.slane %v1061, %v1065
      %v1076 = vunpack.c.l.b16 %v1053
      %v1077 = vunpack.c.l.b16 %v1054
      %v1078 = vunpack.c.l.b16 %v1055
      %v1079 = vunpack.c.l.b16 %v1056
      %v1080 = vunpack.c.l.b16 %v1057
      %v1081 = vunpack.c.l.b16 %v1058
      %v1082 = vunpack.c.l.b16 %v1059
      %v1083 = vunpack.c.l.b16 %v1060
      %v1084 = vpack.c.b16 %v1077, %v1076
      %v1085 = vpack.c.b16 %v1079, %v1078
      %v1086 = vpack.c.b16 %v1081, %v1080
      %v1087 = vpack.c.b16 %v1083, %v1082
      %vm1092 = vcmask 523264
      %v1094 = vsel %vm1092, %v1045, 0
      %v1097 = vsel %vm1092, %v1046, 0
      %v1100 = vsel %vm1092, %v1047, 0
      %v1103 = vsel %vm1092, %v1048, 0
      %v1106 = vsel %vm1092, %v1049, 0
      %v1109 = vsel %vm1092, %v1050, 0
      %v1112 = vsel %vm1092, %v1051, 0
      %v1115 = vsel %vm1092, %v1052, 0
      %1117 = vmatprep.subr.bf16.mxu0 0
      %1118 = vmatpush1.bf16.msra.mxu0 0
      %1119 = vmatprep.subr.bf16.mxu0 0
      %1120 = vmatpush1.bf16.msra.mxu0 0
      %1121 = vmatprep.subr.bf16.mxu0 0
      %1122 = vmatpush1.bf16.msra.mxu0 0
      %1123 = vmatprep.subr.bf16.mxu0 0
      %1124 = vmatpush1.bf16.msra.mxu0 0
      %1125 = vmatprep.subr.bf16.mxu0 0
      %1126 = vmatpush1.bf16.msra.mxu0 %v1087
      %1127 = vmatprep.subr.bf16.mxu0 0
      %1128 = vmatpush1.bf16.msra.mxu0 %v1086
      %1129 = vmatprep.subr.bf16.mxu0 0
      %1130 = vmatpush1.bf16.msra.mxu0 %v1085
      %1131 = vmatprep.subr.bf16.mxu0 0
      %1132 = vmatpush1.bf16.msra.mxu0 %v1084
      %1133 = vmatprep.subr.bf16.mxu0 0
      %1134 = vmatpush2.bf16.msra.mxu0 0
      %1135 = vmatprep.subr.bf16.mxu0 0
      %1136 = vmatpush2.bf16.msra.mxu0 0
      %1137 = vmatprep.subr.bf16.mxu0 0
      %1138 = vmatpush2.bf16.msra.mxu0 0
      %1139 = vmatprep.subr.bf16.mxu0 0
      %1140 = vmatpush2.bf16.msra.mxu0 0
      %1141 = vmatprep.subr.bf16.mxu0 0
      %1142 = vmatpush2.bf16.msra.mxu0 0
      %1143 = vmatprep.subr.bf16.mxu0 0
      %1144 = vmatpush2.bf16.msra.mxu0 0
      %1145 = vmatprep.subr.bf16.mxu0 0
      %1146 = vmatpush2.bf16.msra.mxu0 0
      %1147 = vmatprep.subr.bf16.mxu0 0
      %1148 = vmatpush2.bf16.msra.mxu0 0
      %1149 = vmatprep.mubr.bf16.mxu0 0
      %1150 = vmatmul.mubr.bf16.gmra.mxu0 %v1094
      %v1151 = vpop.f32.mrf.mxu0
      %v1152 = vadd.f32 %v1066, %v1151
      %v1153 = vpop.f32.mrf.mxu0
      %v1154 = vpop.f32.mrf.mxu0
      %v1155 = vadd.f32 %v1066, %v1154
      %v1156 = vpop.f32.mrf.mxu0
      %1157 = vmatprep.mubr.bf16.mxu0 0
      %1158 = vmatmul.mubr.bf16.gmra.mxu0 %v1097
      %v1159 = vpop.f32.mrf.mxu0
      %v1160 = vadd.f32 %v1066, %v1159
      %v1161 = vpop.f32.mrf.mxu0
      %v1162 = vpop.f32.mrf.mxu0
      %v1163 = vadd.f32 %v1066, %v1162
      %v1164 = vpop.f32.mrf.mxu0
      %1165 = vmatprep.mubr.bf16.mxu0 0
      %1166 = vmatmul.mubr.bf16.gmra.mxu0 %v1100
      %v1167 = vpop.f32.mrf.mxu0
      %v1168 = vadd.f32 %v1066, %v1167
      %v1169 = vpop.f32.mrf.mxu0
      %v1170 = vpop.f32.mrf.mxu0
      %v1171 = vadd.f32 %v1066, %v1170
      %v1172 = vpop.f32.mrf.mxu0
      %1173 = vmatprep.mubr.bf16.mxu0 0
      %1174 = vmatmul.mubr.bf16.gmra.mxu0 %v1103
      %v1175 = vpop.f32.mrf.mxu0
      %v1176 = vadd.f32 %v1066, %v1175
      %v1177 = vpop.f32.mrf.mxu0
      %v1178 = vpop.f32.mrf.mxu0
      %v1179 = vadd.f32 %v1066, %v1178
      %v1180 = vpop.f32.mrf.mxu0
      %1181 = vmatprep.mubr.bf16.mxu0 0
      %1182 = vmatmul.mubr.bf16.gmra.mxu0 %v1106
      %v1183 = vpop.f32.mrf.mxu0
      %v1184 = vadd.f32 %v1066, %v1183
      %v1185 = vpop.f32.mrf.mxu0
      %v1186 = vpop.f32.mrf.mxu0
      %v1187 = vadd.f32 %v1066, %v1186
      %v1188 = vpop.f32.mrf.mxu0
      %1189 = vmatprep.mubr.bf16.mxu0 0
      %1190 = vmatmul.mubr.bf16.gmra.mxu0 %v1109
      %v1191 = vpop.f32.mrf.mxu0
      %v1192 = vadd.f32 %v1066, %v1191
      %v1193 = vpop.f32.mrf.mxu0
      %v1194 = vpop.f32.mrf.mxu0
      %v1195 = vadd.f32 %v1066, %v1194
      %v1196 = vpop.f32.mrf.mxu0
      %1197 = vmatprep.mubr.bf16.mxu0 0
      %1198 = vmatmul.mubr.bf16.gmra.mxu0 %v1112
      %v1199 = vpop.f32.mrf.mxu0
      %v1200 = vadd.f32 %v1066, %v1199
      %v1201 = vpop.f32.mrf.mxu0
      %v1202 = vpop.f32.mrf.mxu0
      %v1203 = vadd.f32 %v1066, %v1202
      %v1204 = vpop.f32.mrf.mxu0
      %1205 = vmatprep.mubr.bf16.mxu0 0
      %1206 = vmatmul.mubr.bf16.gmra.mxu0 %v1115
      %v1207 = vpop.f32.mrf.mxu0
      %v1208 = vadd.f32 %v1066, %v1207
      %v1209 = vpop.f32.mrf.mxu0
      %v1210 = vpop.f32.mrf.mxu0
      %v1211 = vadd.f32 %v1066, %v1210
      %v1212 = vpop.f32.mrf.mxu0
      %1213 = vdwg.mxu0
      %vm1214 = vcmask 64512
      %1215 = vst.msk [vmem:[%s280] sm:$0xff] %vm1214, %v1152
      %1216 = vst.msk [vmem:[%s280 + $0x8] sm:$0xff] %vm1214, %v1155
      %1217 = vst.msk [vmem:[%s280 + $0x10] sm:$0xff] %vm1214, %v1160
      %1218 = vst.msk [vmem:[%s280 + $0x18] sm:$0xff] %vm1214, %v1163
      %1219 = vst.msk [vmem:[%s280 + $0x20] sm:$0xff] %vm1214, %v1168
      %1220 = vst.msk [vmem:[%s280 + $0x28] sm:$0xff] %vm1214, %v1171
      %1221 = vst.msk [vmem:[%s280 + $0x30] sm:$0xff] %vm1214, %v1176
      %1222 = vst.msk [vmem:[%s280 + $0x38] sm:$0xff] %vm1214, %v1179
      %1223 = vst.msk [vmem:[%s280 + $0x40] sm:$0xff] %vm1214, %v1184
      %1224 = vst.msk [vmem:[%s280 + $0x48] sm:$0xff] %vm1214, %v1187
      %1225 = vst.msk [vmem:[%s280 + $0x50] sm:$0xff] %vm1214, %v1192
      %1226 = vst.msk [vmem:[%s280 + $0x58] sm:$0xff] %vm1214, %v1195
      %1227 = vst.msk [vmem:[%s280 + $0x60] sm:$0xff] %vm1214, %v1200
      %1228 = vst.msk [vmem:[%s280 + $0x68] sm:$0xff] %vm1214, %v1203
      %1229 = vst.msk [vmem:[%s280 + $0x70] sm:$0xff] %vm1214, %v1208
      %1230 = vst.msk [vmem:[%s280 + $0x78] sm:$0xff] %vm1214, %v1211
      %s1231 = smul.u32 16, %s18
      %p1232 = scmp.lt.s32.totalorder %s1231, 31
      %s1233 = scalar_select %p1232, %s1231, 31
      %s1234 = smul.addr %s1233, 8
      %s1235 = scalar_lea.vmem %s7, %s1234
      // Predicated region
      $region49: #{tpu_custom_call.1} parent=47 // pred_check
        %p1236 = pneg %p188
      $region50: #{tpu_custom_call.1} parent=47 // pred_check_branch
        %1238 = sbr.rel (%p1236) target = $region52
      $region51: #{tpu_custom_call.1} parent=47 // pred_region
        %s1239 = smul.u32 16, %s18
      $region52: #{tpu_custom_call.1} parent=47 // pred_fallthru
        _
    $region48: #{tpu_custom_call.1} parent=5 // pred_fallthru
      _
    %p1240 = scmp.le.s32.totalorder 2, %s13
    // Predicated region
    $region53: #{tpu_custom_call.1} parent=5 // pred_check
      %p1241 = pneg %p1240
    $region54: #{tpu_custom_call.1} parent=5 // pred_check_branch
      %1243 = sbr.rel (%p1241) target = $region56
    $region55: #{tpu_custom_call.1} parent=5 // pred_region
      %s1244 = ssub.s32 %s13, 2
      // Predicated region
      $region57: #{tpu_custom_call.1} parent=55 // pred_check
        %p1245 = pneg %p194
      $region58: #{tpu_custom_call.1} parent=55 // pred_check_branch
        %1247 = sbr.rel (%p1245) target = $region60
      $region59: #{tpu_custom_call.1} parent=55 // pred_region
        %s1248 = smul.u32 16, %s19
        %p1249 = scmp.lt.s32.totalorder %s1248, 31
        %s1250 = scalar_select %p1249, %s1248, 31
        %s1251 = smul.addr %s1250, 8
        %s1252 = scalar_lea.vmem %s7, %s1251
      $region60: #{tpu_custom_call.1} parent=55 // pred_fallthru
        _
    $region56: #{tpu_custom_call.1} parent=5 // pred_fallthru
      _
  $region6: #{tpu_custom_call.1} parent=0 // loop_footer
    %s17 = sadd.s32 1, %s13
  $region7: #{tpu_custom_call.1} parent=0 // loop_footer_branch
    %12 = sbr.rel target = $region3
  $region8: #{tpu_custom_call.1} parent=0 // loop_exit
    _

</llo_original>
